<compile_context>
chip_gen: v5e
topology: v5e:2x2
jax: 0.10.0
libtpu: 0.0.40
codegen_flags: <defaults>
</compile_context>

<pallas_src>
import functools

import jax
import jax.numpy as jnp
from jax.experimental import pallas as pl
from jax.experimental.pallas import tpu as pltpu

BN_EPS = 1e-5


def _round_up(x, m):
    return ((x + m - 1) // m) * m


def _action_head_kernel(x_ref, w1_ref, b1_ref, w2_ref, b2_ref, o_ref, acc_ref,
                        *, inv_mt, mt_rem):
    """Grid = (N_tiles, MT_tiles); the MT axis is the streamed reduction."""
    mt_idx = pl.program_id(1)
    last_mt = pl.num_programs(1) - 1

    @pl.when(mt_idx == 0)
    def _init():
        acc_ref[...] = jnp.zeros_like(acc_ref)

    if mt_rem == 0:
        # mt_blk divides MT: every streamed tile is full.  Cast is fused into
        # the reduction (no full-tile f32 temporary).
        acc_ref[...] += jnp.sum(x_ref[...], axis=1, dtype=jnp.float32)
    else:
        # Ragged tail tile: Pallas does not zero-fill out-of-bounds rows of a
        # partial block, so mask them before accumulating.
        @pl.when(mt_idx < last_mt)
        def _full_tile():
            acc_ref[...] += jnp.sum(x_ref[...], axis=1, dtype=jnp.float32)

        @pl.when(mt_idx == last_mt)
        def _tail_tile():
            xt = x_ref[...]
            row = jax.lax.broadcasted_iota(jnp.int32, xt.shape, 1)
            xt = jnp.where(row < mt_rem, xt, jnp.zeros_like(xt))
            acc_ref[...] += jnp.sum(xt, axis=1, dtype=jnp.float32)

    @pl.when(mt_idx == last_mt)
    def _finalize():
        pooled = acc_ref[...] * inv_mt                      # (n_blk, F) f32
        # fc1 (eval-mode BatchNorm folded in) + ReLU.  LHS cast to the resident
        # weight dtype (no-op for f32; bf16 weights -> native bf16 MXU pass),
        # accumulation stays f32.
        h = jnp.dot(pooled.astype(w1_ref.dtype), w1_ref[...],
                    preferred_element_type=jnp.float32) + b1_ref[...]
        h = jnp.maximum(h, 0.0)
        # fc2 (lane-dense: classes zero-padded to a multiple of 128).
        out = jnp.dot(h.astype(w2_ref.dtype), w2_ref[...],
                      preferred_element_type=jnp.float32) + b2_ref[...]
        o_ref[...] = out.astype(o_ref.dtype)


def action_head_classification(feat, params, *, n_blk=128, mt_blk=512,
                               weights_dtype=jnp.float32,
                               vmem_budget_bytes=40 * 1024 * 1024):
    """feat: (N, M, T, J, C) -> logits (N, num_classes) float32 (eval mode)."""
    N, M, T, J, C = feat.shape
    F = J * C
    MT = M * T
    H = params["w1"].shape[1]
    num_classes = params["w2"].shape[1]
    c_pad = _round_up(num_classes, 128)

    # ---- host-side param prep (tiny; once per call) -------------------------
    # Fold eval-mode BatchNorm into fc1 (exact affine fold).
    scale = params["bn_gamma"] * jax.lax.rsqrt(params["bn_var"] + BN_EPS)
    w1f = (params["w1"] * scale).astype(weights_dtype)               # (F, H)
    b1f = ((params["b1"] - params["bn_mean"]) * scale
           + params["bn_beta"]).astype(jnp.float32)                  # (1, H)
    # Lane-dense fc2: zero-pad the class dim to a multiple of 128 (weights only).
    w2p = jnp.zeros((H, c_pad), weights_dtype).at[:, :num_classes].set(
        params["w2"].astype(weights_dtype))
    b2p = jnp.zeros((1, c_pad), jnp.float32).at[:, :num_classes].set(
        params["b2"].astype(jnp.float32))

    # ---- input: pure reshape, no pad / dtype copy ----------------------------
    # (M,T) -> MT (streamed axis), (J,C) -> F (lane axis).  Row-major j*C + c
    # matches the PyTorch permute(0,1,3,4,2) + reshape flattening order.
    x = feat.reshape(N, MT, F)
    x_itemsize = x.dtype.itemsize
    w_itemsize = jnp.dtype(weights_dtype).itemsize

    # ---- tile sizing against the VMEM budget ---------------------------------
    n_blk = N if N <= n_blk else max(8, (n_blk // 8) * 8)
    weight_bytes = (F * H + H * c_pad) * w_itemsize + (H + c_pad) * 4
    fixed_bytes = weight_bytes + 2 * n_blk * c_pad * 4 + n_blk * F * 4
    avail = vmem_budget_bytes - fixed_bytes
    per_mt_row = 2 * n_blk * F * x_itemsize        # double-buffered input tile
    cap = max(8, avail // per_mt_row) if avail > 0 else 8
    mt_blk = min(mt_blk, int(cap))
    if MT <= mt_blk:
        mt_blk = MT                                # single full tile
    else:
        mt_blk = max(8, (mt_blk // 8) * 8)         # (8,128) sublane rule
    mt_rem = MT % mt_blk

    est_vmem = 2 * n_blk * mt_blk * F * x_itemsize + fixed_bytes
    compiler_kwargs = {}
    if est_vmem > (12 << 20):                      # above default scoped limits
        compiler_kwargs["vmem_limit_bytes"] = int(
            min(est_vmem * 1.5 + (4 << 20), 60 << 20))

    grid = (pl.cdiv(N, n_blk), pl.cdiv(MT, mt_blk))

    kernel = functools.partial(_action_head_kernel,
                               inv_mt=1.0 / float(MT), mt_rem=mt_rem)

    resident = pl.Buffered(1)   # constant-index blocks: one DMA, single buffer

    out = pl.pallas_call(
        kernel,
        out_shape=jax.ShapeDtypeStruct((N, c_pad), jnp.float32),
        grid_spec=pltpu.PrefetchScalarGridSpec(
            num_scalar_prefetch=0,
            grid=grid,
            in_specs=[
                # Streamed input tile (double-buffered by the pipeline).
                pl.BlockSpec((n_blk, mt_blk, F), lambda i, j: (i, j, 0)),
                # Weights/biases: constant index map -> resident, single DMA.
                pl.BlockSpec((F, H), lambda i, j: (0, 0),
                             pipeline_mode=resident),
                pl.BlockSpec((1, H), lambda i, j: (0, 0),
                             pipeline_mode=resident),
                pl.BlockSpec((H, c_pad), lambda i, j: (0, 0),
                             pipeline_mode=resident),
                pl.BlockSpec((1, c_pad), lambda i, j: (0, 0),
                             pipeline_mode=resident),
            ],
            # Output block fixed along the reduction axis (written at last j).
            out_specs=pl.BlockSpec((n_blk, c_pad), lambda i, j: (i, 0)),
            scratch_shapes=[pltpu.VMEM((n_blk, F), jnp.float32)],
        ),
        compiler_params=pltpu.CompilerParams(
            dimension_semantics=("parallel", "arbitrary"),
            **compiler_kwargs),
    )(x, w1f, b1f, w2p, b2p)

    return out[:, :num_classes]


def init_params(key, dim_rep, num_joints, num_classes):
    hidden_dim = max(dim_rep * 2, 1024)
    in_dim = dim_rep * num_joints
    k1, k2, k3, k4 = jax.random.split(key, 4)
    # Deterministic synthetic init (roughly PyTorch Linear scale).
    w1 = jax.random.uniform(k1, (in_dim, hidden_dim), jnp.float32,
                            -1.0, 1.0) / jnp.sqrt(jnp.float32(in_dim))
    b1 = jax.random.uniform(k2, (1, hidden_dim), jnp.float32,
                            -1.0, 1.0) / jnp.sqrt(jnp.float32(in_dim))
    w2 = jax.random.uniform(k3, (hidden_dim, num_classes), jnp.float32,
                            -1.0, 1.0) / jnp.sqrt(jnp.float32(hidden_dim))
    b2 = jax.random.uniform(k4, (1, num_classes), jnp.float32,
                            -1.0, 1.0) / jnp.sqrt(jnp.float32(hidden_dim))
    return dict(
        w1=w1, b1=b1, w2=w2, b2=b2,
        bn_gamma=jnp.ones((1, hidden_dim), jnp.float32),
        bn_beta=jnp.zeros((1, hidden_dim), jnp.float32),
        bn_mean=jnp.zeros((1, hidden_dim), jnp.float32),
        bn_var=jnp.ones((1, hidden_dim), jnp.float32),
    )


def reference_forward(feat, params):
    """Pure-JAX reference mirroring the PyTorch forward (eval mode)."""
    N, M, T, J, C = feat.shape
    x = feat.astype(jnp.float32)
    x = jnp.transpose(x, (0, 1, 3, 4, 2)).mean(axis=-1)   # (N, M, J, C)
    x = x.reshape(N, M, J * C).mean(axis=1)               # (N, J*C)
    h = x @ params["w1"] + params["b1"]
    h = (h - params["bn_mean"]) * jax.lax.rsqrt(params["bn_var"] + BN_EPS) \
        * params["bn_gamma"] + params["bn_beta"]
    h = jnp.maximum(h, 0.0)
    return h @ params["w2"] + params["b2"]


if __name__ == "__main__":
    # Small shapes consistent with the module: (N, M, T, J, C)
    N, M, T, J, C = 2, 2, 8, 4, 32        # dim_rep=32, num_joints=4
    num_classes = 60

    key = jax.random.PRNGKey(0)
    k_feat, k_params = jax.random.split(key)
    feat = jax.random.normal(k_feat, (N, M, T, J, C), jnp.float32)
    params = init_params(k_params, dim_rep=C, num_joints=J,
                         num_classes=num_classes)

    out = action_head_classification(feat, params)
    out = jax.block_until_ready(out)

    ref = jax.block_until_ready(reference_forward(feat, params))
    assert out.shape == (N, num_classes)
    assert jnp.allclose(out, ref, atol=1e-3, rtol=1e-3), "mismatch vs reference"

    print("KERNEL_OK")
</pallas_src>

<mosaic_0001>
module attributes {stable_mosaic.version = 11 : i64} {
  func.func @_action_head_kernel(%arg0: i32, %arg1: i32, %arg2: memref<2x16x128xf32, #tpu.memory_space<vmem>>, %arg3: memref<128x1024xf32, #tpu.memory_space<vmem>>, %arg4: memref<1x1024xf32, #tpu.memory_space<vmem>>, %arg5: memref<1024x128xf32, #tpu.memory_space<vmem>>, %arg6: memref<1x128xf32, #tpu.memory_space<vmem>>, %arg7: memref<2x128xf32, #tpu.memory_space<vmem>>, %arg8: memref<2x128xf32, #tpu.memory_space<vmem>>) attributes {dimension_semantics = [#tpu.dimension_semantics<parallel>, #tpu.dimension_semantics<arbitrary>], iteration_bounds = array<i64: 1, 1>, scalar_prefetch = 0 : i64, scratch_operands = 1 : i64, tpu.core_type = #tpu.core_type<tc>, window_params = [{transform_indices = @transform_0, window_bounds = array<i64: 2, 16, 128>}, {pipeline_mode = #tpu.pipeline_mode<synchronous>, transform_indices = @transform_1, window_bounds = array<i64: 128, 1024>}, {pipeline_mode = #tpu.pipeline_mode<synchronous>, transform_indices = @transform_2, window_bounds = array<i64: 1, 1024>}, {pipeline_mode = #tpu.pipeline_mode<synchronous>, transform_indices = @transform_3, window_bounds = array<i64: 1024, 128>}, {pipeline_mode = #tpu.pipeline_mode<synchronous>, transform_indices = @transform_4, window_bounds = array<i64: 1, 128>}, {transform_indices = @transform_5, window_bounds = array<i64: 2, 128>}]} {
    %c0_i32 = arith.constant 0 : i32
    %0 = arith.cmpi eq, %arg1, %c0_i32 : i32
    %1 = arith.extui %0 : i1 to i32
    %c0_i32_0 = arith.constant 0 : i32
    %2 = arith.cmpi ne, %1, %c0_i32_0 : i32
    scf.if %2 {
      %cst_9 = arith.constant 0.000000e+00 : f32
      %11 = vector.broadcast %cst_9 : f32 to vector<2x128xf32>
      %c0_10 = arith.constant 0 : index
      %c0_11 = arith.constant 0 : index
      %12 = vector.load %arg8[%c0_10, %c0_11] : memref<2x128xf32, #tpu.memory_space<vmem>>, vector<2x128xf32>
      tpu.vector_store %arg8[%c0_10, %c0_11], %11 {strides = array<i32>} : memref<2x128xf32, #tpu.memory_space<vmem>>, vector<2x128xf32>,
    } else {
    }
    %c0 = arith.constant 0 : index
    %c0_1 = arith.constant 0 : index
    %3 = vector.load %arg8[%c0, %c0_1] : memref<2x128xf32, #tpu.memory_space<vmem>>, vector<2x128xf32>
    %c0_2 = arith.constant 0 : index
    %c0_3 = arith.constant 0 : index
    %c0_4 = arith.constant 0 : index
    %4 = vector.load %arg2[%c0_2, %c0_3, %c0_4] : memref<2x16x128xf32, #tpu.memory_space<vmem>>, vector<2x16x128xf32>
    %cst = arith.constant dense<0.000000e+00> : vector<2x128xf32>
    %5 = vector.multi_reduction <add>, %4, %cst [1] : vector<2x16x128xf32> to vector<2x128xf32>
    %6 = arith.addf %3, %5 : vector<2x128xf32>
    %c0_5 = arith.constant 0 : index
    %c0_6 = arith.constant 0 : index
    %7 = vector.load %arg8[%c0_5, %c0_6] : memref<2x128xf32, #tpu.memory_space<vmem>>, vector<2x128xf32>
    tpu.vector_store %arg8[%c0_5, %c0_6], %6 {strides = array<i32>} : memref<2x128xf32, #tpu.memory_space<vmem>>, vector<2x128xf32>,
    %c0_i32_7 = arith.constant 0 : i32
    %8 = arith.cmpi eq, %arg1, %c0_i32_7 : i32
    %9 = arith.extui %8 : i1 to i32
    %c0_i32_8 = arith.constant 0 : i32
    %10 = arith.cmpi ne, %9, %c0_i32_8 : i32
    scf.if %10 {
      %c0_9 = arith.constant 0 : index
      %c0_10 = arith.constant 0 : index
      %11 = vector.load %arg8[%c0_9, %c0_10] : memref<2x128xf32, #tpu.memory_space<vmem>>, vector<2x128xf32>
      %cst_11 = arith.constant 6.250000e-02 : f32
      %12 = vector.broadcast %cst_11 : f32 to vector<2x128xf32>
      %13 = arith.mulf %11, %12 : vector<2x128xf32>
      %c0_12 = arith.constant 0 : index
      %c0_13 = arith.constant 0 : index
      %14 = vector.load %arg3[%c0_12, %c0_13] : memref<128x1024xf32, #tpu.memory_space<vmem>>, vector<128x1024xf32>
      %cst_14 = arith.constant dense<0.000000e+00> : vector<2x1024xf32>
      %15 = tpu.matmul %13, %14, %cst_14 {dimension_numbers = #tpu.dot_dimension_numbers<[1], [0], [0], [1], [0, 0, 1, 1], [], []>} : vector<2x128xf32>, vector<128x1024xf32>, vector<2x1024xf32> -> vector<2x1024xf32>
      %c0_15 = arith.constant 0 : index
      %c0_16 = arith.constant 0 : index
      %16 = vector.load %arg4[%c0_15, %c0_16] : memref<1x1024xf32, #tpu.memory_space<vmem>>, vector<1x1024xf32>
      %17 = vector.broadcast %16 : vector<1x1024xf32> to vector<2x1024xf32>
      %18 = arith.addf %15, %17 : vector<2x1024xf32>
      %cst_17 = arith.constant 0.000000e+00 : f32
      %19 = vector.broadcast %cst_17 : f32 to vector<2x1024xf32>
      %20 = arith.maximumf %18, %19 : vector<2x1024xf32>
      %c0_18 = arith.constant 0 : index
      %c0_19 = arith.constant 0 : index
      %21 = vector.load %arg5[%c0_18, %c0_19] : memref<1024x128xf32, #tpu.memory_space<vmem>>, vector<1024x128xf32>
      %cst_20 = arith.constant dense<0.000000e+00> : vector<2x128xf32>
      %22 = tpu.matmul %20, %21, %cst_20 {dimension_numbers = #tpu.dot_dimension_numbers<[1], [0], [0], [1], [0, 0, 1, 1], [], []>} : vector<2x1024xf32>, vector<1024x128xf32>, vector<2x128xf32> -> vector<2x128xf32>
      %c0_21 = arith.constant 0 : index
      %c0_22 = arith.constant 0 : index
      %23 = vector.load %arg6[%c0_21, %c0_22] : memref<1x128xf32, #tpu.memory_space<vmem>>, vector<1x128xf32>
      %24 = vector.broadcast %23 : vector<1x128xf32> to vector<2x128xf32>
      %25 = arith.addf %22, %24 : vector<2x128xf32>
      %c0_23 = arith.constant 0 : index
      %c0_24 = arith.constant 0 : index
      %26 = vector.load %arg7[%c0_23, %c0_24] : memref<2x128xf32, #tpu.memory_space<vmem>>, vector<2x128xf32>
      tpu.vector_store %arg7[%c0_23, %c0_24], %25 {strides = array<i32>} : memref<2x128xf32, #tpu.memory_space<vmem>>, vector<2x128xf32>,
    } else {
    }
    return
  }
  func.func @transform_0(%arg0: i32, %arg1: i32) -> (i32, i32, i32) {
    %c0_i32 = arith.constant 0 : i32
    %c0_i32_0 = arith.constant 0 : i32
    return %arg0, %arg1, %c0_i32 : i32, i32, i32
  }
  func.func @transform_1(%arg0: i32, %arg1: i32) -> (i32, i32) {
    %c0_i32 = arith.constant 0 : i32
    %c0_i32_0 = arith.constant 0 : i32
    %c0_i32_1 = arith.constant 0 : i32
    return %c0_i32, %c0_i32_0 : i32, i32
  }
  func.func @transform_2(%arg0: i32, %arg1: i32) -> (i32, i32) {
    %c0_i32 = arith.constant 0 : i32
    %c0_i32_0 = arith.constant 0 : i32
    %c0_i32_1 = arith.constant 0 : i32
    return %c0_i32, %c0_i32_0 : i32, i32
  }
  func.func @transform_3(%arg0: i32, %arg1: i32) -> (i32, i32) {
    %c0_i32 = arith.constant 0 : i32
    %c0_i32_0 = arith.constant 0 : i32
    %c0_i32_1 = arith.constant 0 : i32
    return %c0_i32, %c0_i32_0 : i32, i32
  }
  func.func @transform_4(%arg0: i32, %arg1: i32) -> (i32, i32) {
    %c0_i32 = arith.constant 0 : i32
    %c0_i32_0 = arith.constant 0 : i32
    %c0_i32_1 = arith.constant 0 : i32
    return %c0_i32, %c0_i32_0 : i32, i32
  }
  func.func @transform_5(%arg0: i32, %arg1: i32) -> (i32, i32) {
    %c0_i32 = arith.constant 0 : i32
    %c0_i32_0 = arith.constant 0 : i32
    return %arg0, %c0_i32 : i32, i32
  }
}

</mosaic_0001>

<llo_original>
// kernel: tpu_custom_call.1
$region0: #{tpu_custom_call.1}
  #allocation0 [shape = 'u32[]', space=smem, size = 0x4, offset = 0x4, fixed_abs, tag = 'smem constant byte address 0x4 - core index']
  #allocation1 [shape = 'u32[72,128]{1,0:T(1,128)}', space=vmem, size = 0x9000, scoped, tag = 'internal scratch']
  #allocation2 [shape = 'f32[2,128]{1,0:T(2,128)}', space=vmem, size = 0x400, scoped, tag = 'scratch operand']
  %s0 = inlined_call_operand.hbm [shape: f32[2,16,128], index: 0, kind: input, shape index: {}]
  %s1 = inlined_call_operand.hbm [shape: f32[128,1024], index: 1, kind: input, shape index: {}]
  %s2 = inlined_call_operand.hbm [shape: f32[1,1024], index: 2, kind: input, shape index: {}]
  %s3 = inlined_call_operand.hbm [shape: f32[1024,128], index: 3, kind: input, shape index: {}]
  %s4 = inlined_call_operand.vmem [shape: f32[1,128], index: 4, kind: input, shape index: {}]
  %s5 = inlined_call_operand.hbm [shape: f32[2,128], index: 5, kind: output, shape index: {}]
  %s6 = sld [smem:[#allocation0]]
  $region54: #{tpu_custom_call.1} parent=0
    _
  %s8 = ssub.s32 1, %s6
  %s9 = scalar_select 0, %s8, %s6
  $region1: #{tpu_custom_call.1} parent=0
    #allocation3 [shape = 'u8[16384]{0}', space=vmem, size = 0x4000, scoped, tag = 'input window, operand 0, single buffered']
    #allocation4 [shape = 's32[1]{0}', space=sflag, size = 0x4, scoped, tag = 'scoped memory for tpu_custom_call.1']
    #allocation5 [shape = 's32[1]{0}', space=sflag, size = 0x4, scoped, tag = 'scoped memory for tpu_custom_call.1']
    #allocation6 [shape = 'u8[524288]{0}', space=vmem, size = 0x80000, scoped, tag = 'input window, operand 1, single buffered']
    #allocation7 [shape = 's32[1]{0}', space=sflag, size = 0x4, scoped, tag = 'scoped memory for tpu_custom_call.1']
    #allocation8 [shape = 'u8[4096]{0}', space=vmem, size = 0x1000, scoped, tag = 'input window, operand 2, single buffered']
    #allocation9 [shape = 'u8[524288]{0}', space=vmem, size = 0x80000, scoped, tag = 'input window, operand 3, single buffered']
    #allocation10 [shape = 's32[1]{0}', space=sflag, size = 0x4, scoped, tag = 'scoped memory for tpu_custom_call.1']
    #allocation11 [shape = 'u8[1024]{0}', space=vmem, size = 0x400, scoped, tag = 'output window, operand 0, single buffered']
    %10 = vsyncpa [#allocation4], 0
    %11 = vsyncpa [#allocation7], 0
    %12 = vsyncpa [#allocation10], 0
    %13 = vsyncpa [#allocation5], 0
    // Predicated region
    $region2: #{tpu_custom_call.1} parent=1 // pred_check
      _
    $region3: #{tpu_custom_call.1} parent=1 // pred_check_branch
      %15 = sbr.rel (0) target = $region5
    $region4: #{tpu_custom_call.1} parent=1 // pred_region
      %17 = vsyncadd [#allocation4], 0
      %s18 = sshll.u32 %s0, 4
      %s19 = int_to_ptr.hbm [resolvable:$true] %s18
      %s20 = sshll.u32 [#allocation3], 4
      %s21 = int_to_ptr.vmem [resolvable:$true] %s20
      %26 = dma.hbm_to_vmem [thread:$0]  %s19, 512, %s21, [#allocation4], 128, 128, 8
    $region5: #{tpu_custom_call.1} parent=1 // pred_fallthru
      _
    // Predicated region
    $region6: #{tpu_custom_call.1} parent=1 // pred_check
      _
    $region7: #{tpu_custom_call.1} parent=1 // pred_check_branch
      %28 = sbr.rel (0) target = $region9
    $region8: #{tpu_custom_call.1} parent=1 // pred_region
      %30 = vsyncadd [#allocation7], 0
      %s31 = sshll.u32 %s1, 4
      %s32 = int_to_ptr.hbm [resolvable:$true] %s31
      %s33 = sshll.u32 [#allocation6], 4
      %s34 = int_to_ptr.vmem [resolvable:$true] %s33
      %39 = dma.hbm_to_vmem [thread:$0]  %s32, 16384, %s34, [#allocation7], 1024, 1024, 64
    $region9: #{tpu_custom_call.1} parent=1 // pred_fallthru
      _
    // Predicated region
    $region10: #{tpu_custom_call.1} parent=1 // pred_check
      _
    $region11: #{tpu_custom_call.1} parent=1 // pred_check_branch
      %41 = sbr.rel (0) target = $region13
    $region12: #{tpu_custom_call.1} parent=1 // pred_region
      %43 = vsyncadd [#allocation7], 0
      %s45 = sshll.u32 %s2, 4
      %s46 = int_to_ptr.hbm [resolvable:$true] %s45
      %s47 = sshll.u32 [#allocation8], 4
      %s48 = int_to_ptr.vmem [resolvable:$true] %s47
      %50 = dma.hbm_to_vmem [thread:$0]  %s46, 128, %s48, [#allocation7]
    $region13: #{tpu_custom_call.1} parent=1 // pred_fallthru
      _
    // Predicated region
    $region14: #{tpu_custom_call.1} parent=1 // pred_check
      _
    $region15: #{tpu_custom_call.1} parent=1 // pred_check_branch
      %52 = sbr.rel (0) target = $region17
    $region16: #{tpu_custom_call.1} parent=1 // pred_region
      %54 = vsyncadd [#allocation10], 0
      %s55 = sshll.u32 %s3, 4
      %s56 = int_to_ptr.hbm [resolvable:$true] %s55
      %s57 = sshll.u32 [#allocation9], 4
      %s58 = int_to_ptr.vmem [resolvable:$true] %s57
      %63 = dma.hbm_to_vmem [thread:$0]  %s56, 16384, %s58, [#allocation10], 128, 128, 8
    $region17: #{tpu_custom_call.1} parent=1 // pred_fallthru
      _
    // Predicated region
    $region18: #{tpu_custom_call.1} parent=1 // pred_check
      _
    $region19: #{tpu_custom_call.1} parent=1 // pred_check_branch
      %65 = sbr.rel (0) target = $region21
    $region20: #{tpu_custom_call.1} parent=1 // pred_region
      _
    $region21: #{tpu_custom_call.1} parent=1 // pred_fallthru
      _
    // Predicated region
    $region22: #{tpu_custom_call.1} parent=1 // pred_check
      _
    $region23: #{tpu_custom_call.1} parent=1 // pred_check_branch
      %67 = sbr.rel (0) target = $region25
    $region24: #{tpu_custom_call.1} parent=1 // pred_region
      %69 = dma.done [#allocation4], 512
    $region25: #{tpu_custom_call.1} parent=1 // pred_fallthru
      _
    // Predicated region
    $region26: #{tpu_custom_call.1} parent=1 // pred_check
      _
    $region27: #{tpu_custom_call.1} parent=1 // pred_check_branch
      %71 = sbr.rel (0) target = $region29
    $region28: #{tpu_custom_call.1} parent=1 // pred_region
      %73 = dma.done [#allocation7], 16384
    $region29: #{tpu_custom_call.1} parent=1 // pred_fallthru
      _
    // Predicated region
    $region30: #{tpu_custom_call.1} parent=1 // pred_check
      _
    $region31: #{tpu_custom_call.1} parent=1 // pred_check_branch
      %75 = sbr.rel (0) target = $region33
    $region32: #{tpu_custom_call.1} parent=1 // pred_region
      %77 = dma.done [#allocation7], 128
    $region33: #{tpu_custom_call.1} parent=1 // pred_fallthru
      _
    // Predicated region
    $region34: #{tpu_custom_call.1} parent=1 // pred_check
      _
    $region35: #{tpu_custom_call.1} parent=1 // pred_check_branch
      %79 = sbr.rel (0) target = $region37
    $region36: #{tpu_custom_call.1} parent=1 // pred_region
      %81 = dma.done [#allocation10], 16384
    $region37: #{tpu_custom_call.1} parent=1 // pred_fallthru
      _
    %p82 = scmp.eq.s32.totalorder 0, 0
    // Predicated region
    $region38: #{tpu_custom_call.1} parent=1 // pred_check
      %p83 = pneg %p82
    $region39: #{tpu_custom_call.1} parent=1 // pred_check_branch
      %85 = sbr.rel (%p83) target = $region41
    $region40: #{tpu_custom_call.1} parent=1 // pred_region
      %86 = vst [vmem:[#allocation2] sm:$0x3] 0.0
    $region41: #{tpu_custom_call.1} parent=1 // pred_fallthru
      _
    %v87 = vld [vmem:[#allocation2] sm:$0x3]
    %v88 = vld [vmem:[#allocation3] sm:$0xff]
    %v89 = vld [vmem:[#allocation3 + $0x8] sm:$0xff]
    %v90 = vld [vmem:[#allocation3 + $0x10] sm:$0xff]
    %v91 = vld [vmem:[#allocation3 + $0x18] sm:$0xff]
    %v92 = vadd.f32 %v88, %v89
    %v93 = vrot.slane %v92, 4
    %v94 = vadd.f32 %v92, %v93
    %v95 = vrot.slane %v94, 2
    %v96 = vadd.f32 %v94, %v95
    %v97 = vrot.slane %v96, 1
    %v98 = vadd.f32 %v96, %v97
    %v99 = vadd.f32 %v90, %v91
    %v100 = vrot.slane %v99, 4
    %v101 = vadd.f32 %v99, %v100
    %v102 = vrot.slane %v101, 2
    %v103 = vadd.f32 %v101, %v102
    %v104 = vrot.slane %v103, 1
    %v105 = vadd.f32 %v103, %v104
    %vm108 = vcmask 1041409
    %v109 = vsel %vm108, %v105, %v98
    %v111 = vadd.f32 %v87, %v109
    %112 = vst [vmem:[#allocation2] sm:$0x3] %v111
    // Predicated region
    $region42: #{tpu_custom_call.1} parent=1 // pred_check
      %p113 = pneg %p82
    $region43: #{tpu_custom_call.1} parent=1 // pred_check_branch
      %115 = sbr.rel (%p113) target = $region45
    $region44: #{tpu_custom_call.1} parent=1 // pred_region
      %v116 = vld [vmem:[#allocation2] sm:$0x3]
      %v117 = vmul.f32 %v116, 0.0625
      %v118 = vld [vmem:[#allocation6] sm:$0xff]
      %v119 = vld [vmem:[#allocation6 + $0x8] sm:$0xff]
      %v120 = vld [vmem:[#allocation6 + $0x10] sm:$0xff]
      %v121 = vld [vmem:[#allocation6 + $0x18] sm:$0xff]
      %v122 = vld [vmem:[#allocation6 + $0x20] sm:$0xff]
      %v123 = vld [vmem:[#allocation6 + $0x28] sm:$0xff]
      %v124 = vld [vmem:[#allocation6 + $0x30] sm:$0xff]
      %v125 = vld [vmem:[#allocation6 + $0x38] sm:$0xff]
      %v126 = vld [vmem:[#allocation6 + $0x40] sm:$0xff]
      %v127 = vld [vmem:[#allocation6 + $0x48] sm:$0xff]
      %v128 = vld [vmem:[#allocation6 + $0x50] sm:$0xff]
      %v129 = vld [vmem:[#allocation6 + $0x58] sm:$0xff]
      %v130 = vld [vmem:[#allocation6 + $0x60] sm:$0xff]
      %v131 = vld [vmem:[#allocation6 + $0x68] sm:$0xff]
      %v132 = vld [vmem:[#allocation6 + $0x70] sm:$0xff]
      %v133 = vld [vmem:[#allocation6 + $0x78] sm:$0xff]
      %v134 = vld [vmem:[#allocation6 + $0x80] sm:$0xff]
      %v135 = vld [vmem:[#allocation6 + $0x88] sm:$0xff]
      %v136 = vld [vmem:[#allocation6 + $0x90] sm:$0xff]
      %v137 = vld [vmem:[#allocation6 + $0x98] sm:$0xff]
      %v138 = vld [vmem:[#allocation6 + $0xa0] sm:$0xff]
      %v139 = vld [vmem:[#allocation6 + $0xa8] sm:$0xff]
      %v140 = vld [vmem:[#allocation6 + $0xb0] sm:$0xff]
      %v141 = vld [vmem:[#allocation6 + $0xb8] sm:$0xff]
      %v142 = vld [vmem:[#allocation6 + $0xc0] sm:$0xff]
      %v143 = vld [vmem:[#allocation6 + $0xc8] sm:$0xff]
      %v144 = vld [vmem:[#allocation6 + $0xd0] sm:$0xff]
      %v145 = vld [vmem:[#allocation6 + $0xd8] sm:$0xff]
      %v146 = vld [vmem:[#allocation6 + $0xe0] sm:$0xff]
      %v147 = vld [vmem:[#allocation6 + $0xe8] sm:$0xff]
      %v148 = vld [vmem:[#allocation6 + $0xf0] sm:$0xff]
      %v149 = vld [vmem:[#allocation6 + $0xf8] sm:$0xff]
      %v150 = vld [vmem:[#allocation6 + $0x100] sm:$0xff]
      %v151 = vld [vmem:[#allocation6 + $0x108] sm:$0xff]
      %v152 = vld [vmem:[#allocation6 + $0x110] sm:$0xff]
      %v153 = vld [vmem:[#allocation6 + $0x118] sm:$0xff]
      %v154 = vld [vmem:[#allocation6 + $0x120] sm:$0xff]
      %v155 = vld [vmem:[#allocation6 + $0x128] sm:$0xff]
      %v156 = vld [vmem:[#allocation6 + $0x130] sm:$0xff]
      %v157 = vld [vmem:[#allocation6 + $0x138] sm:$0xff]
      %v158 = vld [vmem:[#allocation6 + $0x140] sm:$0xff]
      %v159 = vld [vmem:[#allocation6 + $0x148] sm:$0xff]
      %v160 = vld [vmem:[#allocation6 + $0x150] sm:$0xff]
      %v161 = vld [vmem:[#allocation6 + $0x158] sm:$0xff]
      %v162 = vld [vmem:[#allocation6 + $0x160] sm:$0xff]
      %v163 = vld [vmem:[#allocation6 + $0x168] sm:$0xff]
      %v164 = vld [vmem:[#allocation6 + $0x170] sm:$0xff]
      %v165 = vld [vmem:[#allocation6 + $0x178] sm:$0xff]
      %v166 = vld [vmem:[#allocation6 + $0x180] sm:$0xff]
      %v167 = vld [vmem:[#allocation6 + $0x188] sm:$0xff]
      %v168 = vld [vmem:[#allocation6 + $0x190] sm:$0xff]
      %v169 = vld [vmem:[#allocation6 + $0x198] sm:$0xff]
      %v170 = vld [vmem:[#allocation6 + $0x1a0] sm:$0xff]
      %v171 = vld [vmem:[#allocation6 + $0x1a8] sm:$0xff]
      %v172 = vld [vmem:[#allocation6 + $0x1b0] sm:$0xff]
      %v173 = vld [vmem:[#allocation6 + $0x1b8] sm:$0xff]
      %v174 = vld [vmem:[#allocation6 + $0x1c0] sm:$0xff]
      %v175 = vld [vmem:[#allocation6 + $0x1c8] sm:$0xff]
      %v176 = vld [vmem:[#allocation6 + $0x1d0] sm:$0xff]
      %v177 = vld [vmem:[#allocation6 + $0x1d8] sm:$0xff]
      %v178 = vld [vmem:[#allocation6 + $0x1e0] sm:$0xff]
      %v179 = vld [vmem:[#allocation6 + $0x1e8] sm:$0xff]
      %v180 = vld [vmem:[#allocation6 + $0x1f0] sm:$0xff]
      %v181 = vld [vmem:[#allocation6 + $0x1f8] sm:$0xff]
      %v182 = vld [vmem:[#allocation6 + $0x200] sm:$0xff]
      %v183 = vld [vmem:[#allocation6 + $0x208] sm:$0xff]
      %v184 = vld [vmem:[#allocation6 + $0x210] sm:$0xff]
      %v185 = vld [vmem:[#allocation6 + $0x218] sm:$0xff]
      %v186 = vld [vmem:[#allocation6 + $0x220] sm:$0xff]
      %v187 = vld [vmem:[#allocation6 + $0x228] sm:$0xff]
      %v188 = vld [vmem:[#allocation6 + $0x230] sm:$0xff]
      %v189 = vld [vmem:[#allocation6 + $0x238] sm:$0xff]
      %v190 = vld [vmem:[#allocation6 + $0x240] sm:$0xff]
      %v191 = vld [vmem:[#allocation6 + $0x248] sm:$0xff]
      %v192 = vld [vmem:[#allocation6 + $0x250] sm:$0xff]
      %v193 = vld [vmem:[#allocation6 + $0x258] sm:$0xff]
      %v194 = vld [vmem:[#allocation6 + $0x260] sm:$0xff]
      %v195 = vld [vmem:[#allocation6 + $0x268] sm:$0xff]
      %v196 = vld [vmem:[#allocation6 + $0x270] sm:$0xff]
      %v197 = vld [vmem:[#allocation6 + $0x278] sm:$0xff]
      %v198 = vld [vmem:[#allocation6 + $0x280] sm:$0xff]
      %v199 = vld [vmem:[#allocation6 + $0x288] sm:$0xff]
      %v200 = vld [vmem:[#allocation6 + $0x290] sm:$0xff]
      %v201 = vld [vmem:[#allocation6 + $0x298] sm:$0xff]
      %v202 = vld [vmem:[#allocation6 + $0x2a0] sm:$0xff]
      %v203 = vld [vmem:[#allocation6 + $0x2a8] sm:$0xff]
      %v204 = vld [vmem:[#allocation6 + $0x2b0] sm:$0xff]
      %v205 = vld [vmem:[#allocation6 + $0x2b8] sm:$0xff]
      %v206 = vld [vmem:[#allocation6 + $0x2c0] sm:$0xff]
      %v207 = vld [vmem:[#allocation6 + $0x2c8] sm:$0xff]
      %v208 = vld [vmem:[#allocation6 + $0x2d0] sm:$0xff]
      %v209 = vld [vmem:[#allocation6 + $0x2d8] sm:$0xff]
      %v210 = vld [vmem:[#allocation6 + $0x2e0] sm:$0xff]
      %v211 = vld [vmem:[#allocation6 + $0x2e8] sm:$0xff]
      %v212 = vld [vmem:[#allocation6 + $0x2f0] sm:$0xff]
      %v213 = vld [vmem:[#allocation6 + $0x2f8] sm:$0xff]
      %v214 = vld [vmem:[#allocation6 + $0x300] sm:$0xff]
      %v215 = vld [vmem:[#allocation6 + $0x308] sm:$0xff]
      %v216 = vld [vmem:[#allocation6 + $0x310] sm:$0xff]
      %v217 = vld [vmem:[#allocation6 + $0x318] sm:$0xff]
      %v218 = vld [vmem:[#allocation6 + $0x320] sm:$0xff]
      %v219 = vld [vmem:[#allocation6 + $0x328] sm:$0xff]
      %v220 = vld [vmem:[#allocation6 + $0x330] sm:$0xff]
      %v221 = vld [vmem:[#allocation6 + $0x338] sm:$0xff]
      %v222 = vld [vmem:[#allocation6 + $0x340] sm:$0xff]
      %v223 = vld [vmem:[#allocation6 + $0x348] sm:$0xff]
      %v224 = vld [vmem:[#allocation6 + $0x350] sm:$0xff]
      %v225 = vld [vmem:[#allocation6 + $0x358] sm:$0xff]
      %v226 = vld [vmem:[#allocation6 + $0x360] sm:$0xff]
      %v227 = vld [vmem:[#allocation6 + $0x368] sm:$0xff]
      %v228 = vld [vmem:[#allocation6 + $0x370] sm:$0xff]
      %v229 = vld [vmem:[#allocation6 + $0x378] sm:$0xff]
      %v230 = vld [vmem:[#allocation6 + $0x380] sm:$0xff]
      %v231 = vld [vmem:[#allocation6 + $0x388] sm:$0xff]
      %v232 = vld [vmem:[#allocation6 + $0x390] sm:$0xff]
      %v233 = vld [vmem:[#allocation6 + $0x398] sm:$0xff]
      %v234 = vld [vmem:[#allocation6 + $0x3a0] sm:$0xff]
      %v235 = vld [vmem:[#allocation6 + $0x3a8] sm:$0xff]
      %v236 = vld [vmem:[#allocation6 + $0x3b0] sm:$0xff]
      %v237 = vld [vmem:[#allocation6 + $0x3b8] sm:$0xff]
      %v238 = vld [vmem:[#allocation6 + $0x3c0] sm:$0xff]
      %v239 = vld [vmem:[#allocation6 + $0x3c8] sm:$0xff]
      %v240 = vld [vmem:[#allocation6 + $0x3d0] sm:$0xff]
      %v241 = vld [vmem:[#allocation6 + $0x3d8] sm:$0xff]
      %v242 = vld [vmem:[#allocation6 + $0x3e0] sm:$0xff]
      %v243 = vld [vmem:[#allocation6 + $0x3e8] sm:$0xff]
      %v244 = vld [vmem:[#allocation6 + $0x3f0] sm:$0xff]
      %v245 = vld [vmem:[#allocation6 + $0x3f8] sm:$0xff]
      %v246 = vld [vmem:[#allocation8] sm:$0xff]
      %v248 = vperm.slane %v246, 0
      %v249 = vperm.slane %v246, 1
      %v250 = vperm.slane %v246, 2
      %v251 = vperm.slane %v246, 3
      %v252 = vperm.slane %v246, 4
      %v253 = vperm.slane %v246, 5
      %v254 = vperm.slane %v246, 6
      %v255 = vperm.slane %v246, 7
      %264 = vmatpush.msra.mxu0 %v238
      %265 = vmatpush.msra.mxu0 %v230
      %266 = vmatpush.msra.mxu0 %v222
      %267 = vmatpush.msra.mxu0 %v214
      %268 = vmatpush.msra.mxu0 %v206
      %269 = vmatpush.msra.mxu0 %v198
      %270 = vmatpush.msra.mxu0 %v190
      %271 = vmatpush.msra.mxu0 %v182
      %272 = vmatpush.msra.mxu0 %v174
      %273 = vmatpush.msra.mxu0 %v166
      %274 = vmatpush.msra.mxu0 %v158
      %275 = vmatpush.msra.mxu0 %v150
      %276 = vmatpush.msra.mxu0 %v142
      %277 = vmatpush.msra.mxu0 %v134
      %278 = vmatpush.msra.mxu0 %v126
      %279 = vmatpush.msra.mxu0 %v118
      %280 = vmatmul.f32.gmra.mxu0 %v117
      %v281 = vpop.f32.mrf.mxu0
      %v282 = vadd.f32 %v248, %v281
      %283 = vdwg.mxu0
      %284 = vmatpush.msra.mxu0 %v239
      %285 = vmatpush.msra.mxu0 %v231
      %286 = vmatpush.msra.mxu0 %v223
      %287 = vmatpush.msra.mxu0 %v215
      %288 = vmatpush.msra.mxu0 %v207
      %289 = vmatpush.msra.mxu0 %v199
      %290 = vmatpush.msra.mxu0 %v191
      %291 = vmatpush.msra.mxu0 %v183
      %292 = vmatpush.msra.mxu0 %v175
      %293 = vmatpush.msra.mxu0 %v167
      %294 = vmatpush.msra.mxu0 %v159
      %295 = vmatpush.msra.mxu0 %v151
      %296 = vmatpush.msra.mxu0 %v143
      %297 = vmatpush.msra.mxu0 %v135
      %298 = vmatpush.msra.mxu0 %v127
      %299 = vmatpush.msra.mxu0 %v119
      %300 = vmatmul.f32.gmra.mxu0 %v117
      %v301 = vpop.f32.mrf.mxu0
      %v302 = vadd.f32 %v249, %v301
      %303 = vdwg.mxu0
      %304 = vmatpush.msra.mxu0 %v240
      %305 = vmatpush.msra.mxu0 %v232
      %306 = vmatpush.msra.mxu0 %v224
      %307 = vmatpush.msra.mxu0 %v216
      %308 = vmatpush.msra.mxu0 %v208
      %309 = vmatpush.msra.mxu0 %v200
      %310 = vmatpush.msra.mxu0 %v192
      %311 = vmatpush.msra.mxu0 %v184
      %312 = vmatpush.msra.mxu0 %v176
      %313 = vmatpush.msra.mxu0 %v168
      %314 = vmatpush.msra.mxu0 %v160
      %315 = vmatpush.msra.mxu0 %v152
      %316 = vmatpush.msra.mxu0 %v144
      %317 = vmatpush.msra.mxu0 %v136
      %318 = vmatpush.msra.mxu0 %v128
      %319 = vmatpush.msra.mxu0 %v120
      %320 = vmatmul.f32.gmra.mxu0 %v117
      %v321 = vpop.f32.mrf.mxu0
      %v322 = vadd.f32 %v250, %v321
      %323 = vdwg.mxu0
      %324 = vmatpush.msra.mxu0 %v241
      %325 = vmatpush.msra.mxu0 %v233
      %326 = vmatpush.msra.mxu0 %v225
      %327 = vmatpush.msra.mxu0 %v217
      %328 = vmatpush.msra.mxu0 %v209
      %329 = vmatpush.msra.mxu0 %v201
      %330 = vmatpush.msra.mxu0 %v193
      %331 = vmatpush.msra.mxu0 %v185
      %332 = vmatpush.msra.mxu0 %v177
      %333 = vmatpush.msra.mxu0 %v169
      %334 = vmatpush.msra.mxu0 %v161
      %335 = vmatpush.msra.mxu0 %v153
      %336 = vmatpush.msra.mxu0 %v145
      %337 = vmatpush.msra.mxu0 %v137
      %338 = vmatpush.msra.mxu0 %v129
      %339 = vmatpush.msra.mxu0 %v121
      %340 = vmatmul.f32.gmra.mxu0 %v117
      %v341 = vpop.f32.mrf.mxu0
      %v342 = vadd.f32 %v251, %v341
      %343 = vdwg.mxu0
      %344 = vmatpush.msra.mxu0 %v242
      %345 = vmatpush.msra.mxu0 %v234
      %346 = vmatpush.msra.mxu0 %v226
      %347 = vmatpush.msra.mxu0 %v218
      %348 = vmatpush.msra.mxu0 %v210
      %349 = vmatpush.msra.mxu0 %v202
      %350 = vmatpush.msra.mxu0 %v194
      %351 = vmatpush.msra.mxu0 %v186
      %352 = vmatpush.msra.mxu0 %v178
      %353 = vmatpush.msra.mxu0 %v170
      %354 = vmatpush.msra.mxu0 %v162
      %355 = vmatpush.msra.mxu0 %v154
      %356 = vmatpush.msra.mxu0 %v146
      %357 = vmatpush.msra.mxu0 %v138
      %358 = vmatpush.msra.mxu0 %v130
      %359 = vmatpush.msra.mxu0 %v122
      %360 = vmatmul.f32.gmra.mxu0 %v117
      %v361 = vpop.f32.mrf.mxu0
      %v362 = vadd.f32 %v252, %v361
      %363 = vdwg.mxu0
      %364 = vmatpush.msra.mxu0 %v243
      %365 = vmatpush.msra.mxu0 %v235
      %366 = vmatpush.msra.mxu0 %v227
      %367 = vmatpush.msra.mxu0 %v219
      %368 = vmatpush.msra.mxu0 %v211
      %369 = vmatpush.msra.mxu0 %v203
      %370 = vmatpush.msra.mxu0 %v195
      %371 = vmatpush.msra.mxu0 %v187
      %372 = vmatpush.msra.mxu0 %v179
      %373 = vmatpush.msra.mxu0 %v171
      %374 = vmatpush.msra.mxu0 %v163
      %375 = vmatpush.msra.mxu0 %v155
      %376 = vmatpush.msra.mxu0 %v147
      %377 = vmatpush.msra.mxu0 %v139
      %378 = vmatpush.msra.mxu0 %v131
      %379 = vmatpush.msra.mxu0 %v123
      %380 = vmatmul.f32.gmra.mxu0 %v117
      %v381 = vpop.f32.mrf.mxu0
      %v382 = vadd.f32 %v253, %v381
      %383 = vdwg.mxu0
      %384 = vmatpush.msra.mxu0 %v244
      %385 = vmatpush.msra.mxu0 %v236
      %386 = vmatpush.msra.mxu0 %v228
      %387 = vmatpush.msra.mxu0 %v220
      %388 = vmatpush.msra.mxu0 %v212
      %389 = vmatpush.msra.mxu0 %v204
      %390 = vmatpush.msra.mxu0 %v196
      %391 = vmatpush.msra.mxu0 %v188
      %392 = vmatpush.msra.mxu0 %v180
      %393 = vmatpush.msra.mxu0 %v172
      %394 = vmatpush.msra.mxu0 %v164
      %395 = vmatpush.msra.mxu0 %v156
      %396 = vmatpush.msra.mxu0 %v148
      %397 = vmatpush.msra.mxu0 %v140
      %398 = vmatpush.msra.mxu0 %v132
      %399 = vmatpush.msra.mxu0 %v124
      %400 = vmatmul.f32.gmra.mxu0 %v117
      %v401 = vpop.f32.mrf.mxu0
      %v402 = vadd.f32 %v254, %v401
      %403 = vdwg.mxu0
      %404 = vmatpush.msra.mxu0 %v245
      %405 = vmatpush.msra.mxu0 %v237
      %406 = vmatpush.msra.mxu0 %v229
      %407 = vmatpush.msra.mxu0 %v221
      %408 = vmatpush.msra.mxu0 %v213
      %409 = vmatpush.msra.mxu0 %v205
      %410 = vmatpush.msra.mxu0 %v197
      %411 = vmatpush.msra.mxu0 %v189
      %412 = vmatpush.msra.mxu0 %v181
      %413 = vmatpush.msra.mxu0 %v173
      %414 = vmatpush.msra.mxu0 %v165
      %415 = vmatpush.msra.mxu0 %v157
      %416 = vmatpush.msra.mxu0 %v149
      %417 = vmatpush.msra.mxu0 %v141
      %418 = vmatpush.msra.mxu0 %v133
      %419 = vmatpush.msra.mxu0 %v125
      %420 = vmatmul.f32.gmra.mxu0 %v117
      %v421 = vpop.f32.mrf.mxu0
      %v422 = vadd.f32 %v255, %v421
      %423 = vdwg.mxu0
      %v424 = vmax.f32 %v282, 0.0
      %v425 = vmax.f32 %v302, 0.0
      %v426 = vmax.f32 %v322, 0.0
      %v427 = vmax.f32 %v342, 0.0
      %v428 = vmax.f32 %v362, 0.0
      %v429 = vmax.f32 %v382, 0.0
      %v430 = vmax.f32 %v402, 0.0
      %v431 = vmax.f32 %v422, 0.0
      %v432 = vld [vmem:[#allocation9] sm:$0xff]
      %v433 = vld [vmem:[#allocation9 + $0x8] sm:$0xff]
      %v434 = vld [vmem:[#allocation9 + $0x10] sm:$0xff]
      %v435 = vld [vmem:[#allocation9 + $0x18] sm:$0xff]
      %v436 = vld [vmem:[#allocation9 + $0x20] sm:$0xff]
      %v437 = vld [vmem:[#allocation9 + $0x28] sm:$0xff]
      %v438 = vld [vmem:[#allocation9 + $0x30] sm:$0xff]
      %v439 = vld [vmem:[#allocation9 + $0x38] sm:$0xff]
      %v440 = vld [vmem:[#allocation9 + $0x40] sm:$0xff]
      %v441 = vld [vmem:[#allocation9 + $0x48] sm:$0xff]
      %v442 = vld [vmem:[#allocation9 + $0x50] sm:$0xff]
      %v443 = vld [vmem:[#allocation9 + $0x58] sm:$0xff]
      %v444 = vld [vmem:[#allocation9 + $0x60] sm:$0xff]
      %v445 = vld [vmem:[#allocation9 + $0x68] sm:$0xff]
      %v446 = vld [vmem:[#allocation9 + $0x70] sm:$0xff]
      %v447 = vld [vmem:[#allocation9 + $0x78] sm:$0xff]
      %v448 = vld [vmem:[#allocation9 + $0x80] sm:$0xff]
      %v449 = vld [vmem:[#allocation9 + $0x88] sm:$0xff]
      %v450 = vld [vmem:[#allocation9 + $0x90] sm:$0xff]
      %v451 = vld [vmem:[#allocation9 + $0x98] sm:$0xff]
      %v452 = vld [vmem:[#allocation9 + $0xa0] sm:$0xff]
      %v453 = vld [vmem:[#allocation9 + $0xa8] sm:$0xff]
      %v454 = vld [vmem:[#allocation9 + $0xb0] sm:$0xff]
      %v455 = vld [vmem:[#allocation9 + $0xb8] sm:$0xff]
      %v456 = vld [vmem:[#allocation9 + $0xc0] sm:$0xff]
      %v457 = vld [vmem:[#allocation9 + $0xc8] sm:$0xff]
      %v458 = vld [vmem:[#allocation9 + $0xd0] sm:$0xff]
      %v459 = vld [vmem:[#allocation9 + $0xd8] sm:$0xff]
      %v460 = vld [vmem:[#allocation9 + $0xe0] sm:$0xff]
      %v461 = vld [vmem:[#allocation9 + $0xe8] sm:$0xff]
      %v462 = vld [vmem:[#allocation9 + $0xf0] sm:$0xff]
      %v463 = vld [vmem:[#allocation9 + $0xf8] sm:$0xff]
      %v464 = vld [vmem:[#allocation9 + $0x100] sm:$0xff]
      %v465 = vld [vmem:[#allocation9 + $0x108] sm:$0xff]
      %v466 = vld [vmem:[#allocation9 + $0x110] sm:$0xff]
      %v467 = vld [vmem:[#allocation9 + $0x118] sm:$0xff]
      %v468 = vld [vmem:[#allocation9 + $0x120] sm:$0xff]
      %v469 = vld [vmem:[#allocation9 + $0x128] sm:$0xff]
      %v470 = vld [vmem:[#allocation9 + $0x130] sm:$0xff]
      %v471 = vld [vmem:[#allocation9 + $0x138] sm:$0xff]
      %v472 = vld [vmem:[#allocation9 + $0x140] sm:$0xff]
      %v473 = vld [vmem:[#allocation9 + $0x148] sm:$0xff]
      %v474 = vld [vmem:[#allocation9 + $0x150] sm:$0xff]
      %v475 = vld [vmem:[#allocation9 + $0x158] sm:$0xff]
      %v476 = vld [vmem:[#allocation9 + $0x160] sm:$0xff]
      %v477 = vld [vmem:[#allocation9 + $0x168] sm:$0xff]
      %v478 = vld [vmem:[#allocation9 + $0x170] sm:$0xff]
      %v479 = vld [vmem:[#allocation9 + $0x178] sm:$0xff]
      %v480 = vld [vmem:[#allocation9 + $0x180] sm:$0xff]
      %v481 = vld [vmem:[#allocation9 + $0x188] sm:$0xff]
      %v482 = vld [vmem:[#allocation9 + $0x190] sm:$0xff]
      %v483 = vld [vmem:[#allocation9 + $0x198] sm:$0xff]
      %v484 = vld [vmem:[#allocation9 + $0x1a0] sm:$0xff]
      %v485 = vld [vmem:[#allocation9 + $0x1a8] sm:$0xff]
      %v486 = vld [vmem:[#allocation9 + $0x1b0] sm:$0xff]
      %v487 = vld [vmem:[#allocation9 + $0x1b8] sm:$0xff]
      %v488 = vld [vmem:[#allocation9 + $0x1c0] sm:$0xff]
      %v489 = vld [vmem:[#allocation9 + $0x1c8] sm:$0xff]
      %v490 = vld [vmem:[#allocation9 + $0x1d0] sm:$0xff]
      %v491 = vld [vmem:[#allocation9 + $0x1d8] sm:$0xff]
      %v492 = vld [vmem:[#allocation9 + $0x1e0] sm:$0xff]
      %v493 = vld [vmem:[#allocation9 + $0x1e8] sm:$0xff]
      %v494 = vld [vmem:[#allocation9 + $0x1f0] sm:$0xff]
      %v495 = vld [vmem:[#allocation9 + $0x1f8] sm:$0xff]
      %v496 = vld [vmem:[#allocation9 + $0x200] sm:$0xff]
      %v497 = vld [vmem:[#allocation9 + $0x208] sm:$0xff]
      %v498 = vld [vmem:[#allocation9 + $0x210] sm:$0xff]
      %v499 = vld [vmem:[#allocation9 + $0x218] sm:$0xff]
      %v500 = vld [vmem:[#allocation9 + $0x220] sm:$0xff]
      %v501 = vld [vmem:[#allocation9 + $0x228] sm:$0xff]
      %v502 = vld [vmem:[#allocation9 + $0x230] sm:$0xff]
      %v503 = vld [vmem:[#allocation9 + $0x238] sm:$0xff]
      %v504 = vld [vmem:[#allocation9 + $0x240] sm:$0xff]
      %v505 = vld [vmem:[#allocation9 + $0x248] sm:$0xff]
      %v506 = vld [vmem:[#allocation9 + $0x250] sm:$0xff]
      %v507 = vld [vmem:[#allocation9 + $0x258] sm:$0xff]
      %v508 = vld [vmem:[#allocation9 + $0x260] sm:$0xff]
      %v509 = vld [vmem:[#allocation9 + $0x268] sm:$0xff]
      %v510 = vld [vmem:[#allocation9 + $0x270] sm:$0xff]
      %v511 = vld [vmem:[#allocation9 + $0x278] sm:$0xff]
      %v512 = vld [vmem:[#allocation9 + $0x280] sm:$0xff]
      %v513 = vld [vmem:[#allocation9 + $0x288] sm:$0xff]
      %v514 = vld [vmem:[#allocation9 + $0x290] sm:$0xff]
      %v515 = vld [vmem:[#allocation9 + $0x298] sm:$0xff]
      %v516 = vld [vmem:[#allocation9 + $0x2a0] sm:$0xff]
      %v517 = vld [vmem:[#allocation9 + $0x2a8] sm:$0xff]
      %v518 = vld [vmem:[#allocation9 + $0x2b0] sm:$0xff]
      %v519 = vld [vmem:[#allocation9 + $0x2b8] sm:$0xff]
      %v520 = vld [vmem:[#allocation9 + $0x2c0] sm:$0xff]
      %v521 = vld [vmem:[#allocation9 + $0x2c8] sm:$0xff]
      %v522 = vld [vmem:[#allocation9 + $0x2d0] sm:$0xff]
      %v523 = vld [vmem:[#allocation9 + $0x2d8] sm:$0xff]
      %v524 = vld [vmem:[#allocation9 + $0x2e0] sm:$0xff]
      %v525 = vld [vmem:[#allocation9 + $0x2e8] sm:$0xff]
      %v526 = vld [vmem:[#allocation9 + $0x2f0] sm:$0xff]
      %v527 = vld [vmem:[#allocation9 + $0x2f8] sm:$0xff]
      %v528 = vld [vmem:[#allocation9 + $0x300] sm:$0xff]
      %v529 = vld [vmem:[#allocation9 + $0x308] sm:$0xff]
      %v530 = vld [vmem:[#allocation9 + $0x310] sm:$0xff]
      %v531 = vld [vmem:[#allocation9 + $0x318] sm:$0xff]
      %v532 = vld [vmem:[#allocation9 + $0x320] sm:$0xff]
      %v533 = vld [vmem:[#allocation9 + $0x328] sm:$0xff]
      %v534 = vld [vmem:[#allocation9 + $0x330] sm:$0xff]
      %v535 = vld [vmem:[#allocation9 + $0x338] sm:$0xff]
      %v536 = vld [vmem:[#allocation9 + $0x340] sm:$0xff]
      %v537 = vld [vmem:[#allocation9 + $0x348] sm:$0xff]
      %v538 = vld [vmem:[#allocation9 + $0x350] sm:$0xff]
      %v539 = vld [vmem:[#allocation9 + $0x358] sm:$0xff]
      %v540 = vld [vmem:[#allocation9 + $0x360] sm:$0xff]
      %v541 = vld [vmem:[#allocation9 + $0x368] sm:$0xff]
      %v542 = vld [vmem:[#allocation9 + $0x370] sm:$0xff]
      %v543 = vld [vmem:[#allocation9 + $0x378] sm:$0xff]
      %v544 = vld [vmem:[#allocation9 + $0x380] sm:$0xff]
      %v545 = vld [vmem:[#allocation9 + $0x388] sm:$0xff]
      %v546 = vld [vmem:[#allocation9 + $0x390] sm:$0xff]
      %v547 = vld [vmem:[#allocation9 + $0x398] sm:$0xff]
      %v548 = vld [vmem:[#allocation9 + $0x3a0] sm:$0xff]
      %v549 = vld [vmem:[#allocation9 + $0x3a8] sm:$0xff]
      %v550 = vld [vmem:[#allocation9 + $0x3b0] sm:$0xff]
      %v551 = vld [vmem:[#allocation9 + $0x3b8] sm:$0xff]
      %v552 = vld [vmem:[#allocation9 + $0x3c0] sm:$0xff]
      %v553 = vld [vmem:[#allocation9 + $0x3c8] sm:$0xff]
      %v554 = vld [vmem:[#allocation9 + $0x3d0] sm:$0xff]
      %v555 = vld [vmem:[#allocation9 + $0x3d8] sm:$0xff]
      %v556 = vld [vmem:[#allocation9 + $0x3e0] sm:$0xff]
      %v557 = vld [vmem:[#allocation9 + $0x3e8] sm:$0xff]
      %v558 = vld [vmem:[#allocation9 + $0x3f0] sm:$0xff]
      %v559 = vld [vmem:[#allocation9 + $0x3f8] sm:$0xff]
      %v560 = vld [vmem:[%s4] sm:$0x1]
      %v562 = vperm.slane %v560, 0
      %564 = vmatpush.msra.mxu0 %v447
      %565 = vmatpush.msra.mxu0 %v446
      %566 = vmatpush.msra.mxu0 %v445
      %567 = vmatpush.msra.mxu0 %v444
      %568 = vmatpush.msra.mxu0 %v443
      %569 = vmatpush.msra.mxu0 %v442
      %570 = vmatpush.msra.mxu0 %v441
      %571 = vmatpush.msra.mxu0 %v440
      %572 = vmatpush.msra.mxu0 %v439
      %573 = vmatpush.msra.mxu0 %v438
      %574 = vmatpush.msra.mxu0 %v437
      %575 = vmatpush.msra.mxu0 %v436
      %576 = vmatpush.msra.mxu0 %v435
      %577 = vmatpush.msra.mxu0 %v434
      %578 = vmatpush.msra.mxu0 %v433
      %579 = vmatpush.msra.mxu0 %v432
      %580 = vmatmul.f32.gmra.mxu0 %v424
      %v581 = vpop.f32.mrf.mxu0
      %v582 = vadd.f32 %v562, %v581
      %583 = vdwg.mxu0
      %584 = vmatpush.msra.mxu0 %v463
      %585 = vmatpush.msra.mxu0 %v462
      %586 = vmatpush.msra.mxu0 %v461
      %587 = vmatpush.msra.mxu0 %v460
      %588 = vmatpush.msra.mxu0 %v459
      %589 = vmatpush.msra.mxu0 %v458
      %590 = vmatpush.msra.mxu0 %v457
      %591 = vmatpush.msra.mxu0 %v456
      %592 = vmatpush.msra.mxu0 %v455
      %593 = vmatpush.msra.mxu0 %v454
      %594 = vmatpush.msra.mxu0 %v453
      %595 = vmatpush.msra.mxu0 %v452
      %596 = vmatpush.msra.mxu0 %v451
      %597 = vmatpush.msra.mxu0 %v450
      %598 = vmatpush.msra.mxu0 %v449
      %599 = vmatpush.msra.mxu0 %v448
      %600 = vmatmul.f32.gmra.mxu0 %v425
      %v601 = vpop.f32.mrf.mxu0
      %v602 = vadd.f32 %v582, %v601
      %603 = vdwg.mxu0
      %604 = vmatpush.msra.mxu0 %v479
      %605 = vmatpush.msra.mxu0 %v478
      %606 = vmatpush.msra.mxu0 %v477
      %607 = vmatpush.msra.mxu0 %v476
      %608 = vmatpush.msra.mxu0 %v475
      %609 = vmatpush.msra.mxu0 %v474
      %610 = vmatpush.msra.mxu0 %v473
      %611 = vmatpush.msra.mxu0 %v472
      %612 = vmatpush.msra.mxu0 %v471
      %613 = vmatpush.msra.mxu0 %v470
      %614 = vmatpush.msra.mxu0 %v469
      %615 = vmatpush.msra.mxu0 %v468
      %616 = vmatpush.msra.mxu0 %v467
      %617 = vmatpush.msra.mxu0 %v466
      %618 = vmatpush.msra.mxu0 %v465
      %619 = vmatpush.msra.mxu0 %v464
      %620 = vmatmul.f32.gmra.mxu0 %v426
      %v621 = vpop.f32.mrf.mxu0
      %v622 = vadd.f32 %v602, %v621
      %623 = vdwg.mxu0
      %624 = vmatpush.msra.mxu0 %v495
      %625 = vmatpush.msra.mxu0 %v494
      %626 = vmatpush.msra.mxu0 %v493
      %627 = vmatpush.msra.mxu0 %v492
      %628 = vmatpush.msra.mxu0 %v491
      %629 = vmatpush.msra.mxu0 %v490
      %630 = vmatpush.msra.mxu0 %v489
      %631 = vmatpush.msra.mxu0 %v488
      %632 = vmatpush.msra.mxu0 %v487
      %633 = vmatpush.msra.mxu0 %v486
      %634 = vmatpush.msra.mxu0 %v485
      %635 = vmatpush.msra.mxu0 %v484
      %636 = vmatpush.msra.mxu0 %v483
      %637 = vmatpush.msra.mxu0 %v482
      %638 = vmatpush.msra.mxu0 %v481
      %639 = vmatpush.msra.mxu0 %v480
      %640 = vmatmul.f32.gmra.mxu0 %v427
      %v641 = vpop.f32.mrf.mxu0
      %v642 = vadd.f32 %v622, %v641
      %643 = vdwg.mxu0
      %644 = vmatpush.msra.mxu0 %v511
      %645 = vmatpush.msra.mxu0 %v510
      %646 = vmatpush.msra.mxu0 %v509
      %647 = vmatpush.msra.mxu0 %v508
      %648 = vmatpush.msra.mxu0 %v507
      %649 = vmatpush.msra.mxu0 %v506
      %650 = vmatpush.msra.mxu0 %v505
      %651 = vmatpush.msra.mxu0 %v504
      %652 = vmatpush.msra.mxu0 %v503
      %653 = vmatpush.msra.mxu0 %v502
      %654 = vmatpush.msra.mxu0 %v501
      %655 = vmatpush.msra.mxu0 %v500
      %656 = vmatpush.msra.mxu0 %v499
      %657 = vmatpush.msra.mxu0 %v498
      %658 = vmatpush.msra.mxu0 %v497
      %659 = vmatpush.msra.mxu0 %v496
      %660 = vmatmul.f32.gmra.mxu0 %v428
      %v661 = vpop.f32.mrf.mxu0
      %v662 = vadd.f32 %v642, %v661
      %663 = vdwg.mxu0
      %664 = vmatpush.msra.mxu0 %v527
      %665 = vmatpush.msra.mxu0 %v526
      %666 = vmatpush.msra.mxu0 %v525
      %667 = vmatpush.msra.mxu0 %v524
      %668 = vmatpush.msra.mxu0 %v523
      %669 = vmatpush.msra.mxu0 %v522
      %670 = vmatpush.msra.mxu0 %v521
      %671 = vmatpush.msra.mxu0 %v520
      %672 = vmatpush.msra.mxu0 %v519
      %673 = vmatpush.msra.mxu0 %v518
      %674 = vmatpush.msra.mxu0 %v517
      %675 = vmatpush.msra.mxu0 %v516
      %676 = vmatpush.msra.mxu0 %v515
      %677 = vmatpush.msra.mxu0 %v514
      %678 = vmatpush.msra.mxu0 %v513
      %679 = vmatpush.msra.mxu0 %v512
      %680 = vmatmul.f32.gmra.mxu0 %v429
      %v681 = vpop.f32.mrf.mxu0
      %v682 = vadd.f32 %v662, %v681
      %683 = vdwg.mxu0
      %684 = vmatpush.msra.mxu0 %v543
      %685 = vmatpush.msra.mxu0 %v542
      %686 = vmatpush.msra.mxu0 %v541
      %687 = vmatpush.msra.mxu0 %v540
      %688 = vmatpush.msra.mxu0 %v539
      %689 = vmatpush.msra.mxu0 %v538
      %690 = vmatpush.msra.mxu0 %v537
      %691 = vmatpush.msra.mxu0 %v536
      %692 = vmatpush.msra.mxu0 %v535
      %693 = vmatpush.msra.mxu0 %v534
      %694 = vmatpush.msra.mxu0 %v533
      %695 = vmatpush.msra.mxu0 %v532
      %696 = vmatpush.msra.mxu0 %v531
      %697 = vmatpush.msra.mxu0 %v530
      %698 = vmatpush.msra.mxu0 %v529
      %699 = vmatpush.msra.mxu0 %v528
      %700 = vmatmul.f32.gmra.mxu0 %v430
      %v701 = vpop.f32.mrf.mxu0
      %v702 = vadd.f32 %v682, %v701
      %703 = vdwg.mxu0
      %704 = vmatpush.msra.mxu0 %v559
      %705 = vmatpush.msra.mxu0 %v558
      %706 = vmatpush.msra.mxu0 %v557
      %707 = vmatpush.msra.mxu0 %v556
      %708 = vmatpush.msra.mxu0 %v555
      %709 = vmatpush.msra.mxu0 %v554
      %710 = vmatpush.msra.mxu0 %v553
      %711 = vmatpush.msra.mxu0 %v552
      %712 = vmatpush.msra.mxu0 %v551
      %713 = vmatpush.msra.mxu0 %v550
      %714 = vmatpush.msra.mxu0 %v549
      %715 = vmatpush.msra.mxu0 %v548
      %716 = vmatpush.msra.mxu0 %v547
      %717 = vmatpush.msra.mxu0 %v546
      %718 = vmatpush.msra.mxu0 %v545
      %719 = vmatpush.msra.mxu0 %v544
      %720 = vmatmul.f32.gmra.mxu0 %v431
      %v721 = vpop.f32.mrf.mxu0
      %v722 = vadd.f32 %v702, %v721
      %723 = vdwg.mxu0
      %724 = vst [vmem:[#allocation11] sm:$0x3] %v722
    $region45: #{tpu_custom_call.1} parent=1 // pred_fallthru
      _
    // Predicated region
    $region46: #{tpu_custom_call.1} parent=1 // pred_check
      _
    $region47: #{tpu_custom_call.1} parent=1 // pred_check_branch
      %726 = sbr.rel (0) target = $region49
    $region48: #{tpu_custom_call.1} parent=1 // pred_region
      %728 = vsyncadd [#allocation5], 0
      %s730 = sshll.u32 [#allocation11], 4
      %s731 = int_to_ptr.vmem [resolvable:$true] %s730
      %s732 = sshll.u32 %s5, 4
      %s733 = int_to_ptr.hbm [resolvable:$true] %s732
      %735 = dma.vmem_to_hbm [thread:$0]  %s731, 32, %s733, [#allocation5]
    $region49: #{tpu_custom_call.1} parent=1 // pred_fallthru
      _
    // Predicated region
    $region50: #{tpu_custom_call.1} parent=1 // pred_check
      _
    $region51: #{tpu_custom_call.1} parent=1 // pred_check_branch
      %737 = sbr.rel (0) target = $region53
    $region52: #{tpu_custom_call.1} parent=1 // pred_region
      %739 = dma.done [#allocation5], 32
    $region53: #{tpu_custom_call.1} parent=1 // pred_fallthru
      _
    %740 = vsyncpa [#allocation4], 1
    %741 = vsyncpa [#allocation7], 1
    %742 = vsyncpa [#allocation10], 1
    %743 = vsyncpa [#allocation5], 1

</llo_original>
